<compile_context>
chip_gen: v5e
topology: v5e:2x2
jax: 0.10.0
libtpu: 0.0.40
codegen_flags: <defaults>
</compile_context>

<pallas_src>
import functools

import jax
import jax.numpy as jnp
from jax.experimental import pallas as pl
from jax.experimental.pallas import tpu as pltpu

MARGIN = 1.0
EPS = 1e-6  # nn.PairwiseDistance default eps (added to the difference)

LANE = 128
MAX_TILE_ROWS = 2048                    # ~85% of HBM roofline is reached well below this
INPUT_VMEM_BUDGET = 8 * 1024 * 1024     # double-buffered input footprint target


def _round_up(a, b):
    return ((a + b - 1) // b) * b


def _sublane_multiple(dtype):
    # f32 -> 8, bf16 -> 16, int8/fp8 -> 32 (native sublane packing granularity).
    return max(8, 32 // jnp.dtype(dtype).itemsize)


def _num_tensorcores():
    """Best-effort TensorCore-per-chip count (2 on v7x, 1 on v5e/v6e)."""
    # TODO(synk): verify via profile that the leading "parallel" axis actually
    # shards across the two v7x TCs; if not, switch to pltpu.CORE_PARALLEL.
    try:
        info = pltpu.get_tpu_info()
    except Exception:
        return 1
    for attr in ("num_cores", "core_count", "num_tensorcores", "tensor_core_count"):
        v = getattr(info, attr, None)
        if isinstance(v, int) and 1 <= v <= 16:
            return min(int(v), 2)
    return 1


def _pairwise_loss_kernel(x_ref, x1_ref, y_ref, o_ref, *, tile_n,
                          tiles_per_split, n_valid):
    g = pl.program_id(0)  # core-split index            ("parallel")
    i = pl.program_id(1)  # reduction step within split ("arbitrary")

    # Zero this split's resident accumulator slab on its first step.
    @pl.when(i == 0)
    def _():
        o_ref[...] = jnp.zeros_like(o_ref)

    xf = x_ref[...].astype(jnp.float32)
    x1f = x1_ref[...].astype(jnp.float32)
    diff = xf - x1f + EPS
    sq = jnp.sum(diff * diff, axis=-1, keepdims=True)      # (tile_n, 1)  == d^2
    dist = jnp.sqrt(sq)                                     # (tile_n, 1)
    y = y_ref[...]                                          # (tile_n, 1) f32
    hinge = jnp.maximum(0.0, MARGIN - dist)
    # Reuse sq (== dist**2) for the (1 - y) branch.
    losses = 0.5 * ((1.0 - y) * sq + y * (hinge * hinge))   # (tile_n, 1)

    row0 = (g * tiles_per_split + i) * tile_n

    # Fast path: tile entirely within the valid rows -> no mask work.
    @pl.when(row0 + tile_n <= n_valid)
    def _():
        o_ref[...] += jnp.sum(losses)

    # Ragged path: mask rows >= n_valid (select, so OOB garbage never enters).
    @pl.when(row0 + tile_n > n_valid)
    def _():
        rows = jax.lax.broadcasted_iota(jnp.int32, (tile_n, 1), 0) + row0
        o_ref[...] += jnp.sum(jnp.where(rows < n_valid, losses, 0.0))


def pairwise_loss(x, x1, y, *, tile_n=None, splits=None):
    """x, x1: (N, D) in native dtype; y: (N,). Returns scalar float32 mean loss."""
    n, d = x.shape
    assert x1.shape == (n, d), (x.shape, x1.shape)

    # y is tiny; a (N, 1) f32 column is fine (no pad needed, ragged block masked).
    y2 = jnp.asarray(y).reshape(n, 1).astype(jnp.float32)

    # Sublane granularity for the row tile (covers f32 / bf16 / int8 packing).
    mult = max(_sublane_multiple(x.dtype), _sublane_multiple(x1.dtype))

    # Lane-padded, double-buffered VMEM footprint per row of the tile.
    isz_x = jnp.dtype(x.dtype).itemsize
    isz_x1 = jnp.dtype(x1.dtype).itemsize
    bytes_per_row = 2 * (_round_up(d, LANE) * isz_x
                         + _round_up(d, LANE) * isz_x1
                         + LANE * 4)                       # (tile_n,1) f32 y block

    if tile_n is None:
        tile_n = INPUT_VMEM_BUDGET // bytes_per_row
        tile_n = min(tile_n, MAX_TILE_ROWS, _round_up(n, mult))
        tile_n = max(mult, (tile_n // mult) * mult)
    tile_n = int(tile_n)
    assert tile_n % mult == 0, (tile_n, mult)

    n_tiles = pl.cdiv(n, tile_n)
    if splits is None:
        splits = _num_tensorcores()
    splits = max(1, min(int(splits), n_tiles))
    tiles_per_split = pl.cdiv(n_tiles, splits)

    # Never request a block that lies entirely past the array: clamp the block
    # index (its rows are >= n_valid, so the mask zeroes them anyway).
    if splits * tiles_per_split > n_tiles:
        def block_idx(g, i):
            return jnp.minimum(g * tiles_per_split + i, n_tiles - 1)
    else:
        def block_idx(g, i):
            return g * tiles_per_split + i

    kernel = functools.partial(
        _pairwise_loss_kernel,
        tile_n=tile_n,
        tiles_per_split=tiles_per_split,
        n_valid=n,
    )

    # Explicit VMEM limit sized from the real (lane-padded) footprint, with a
    # 16 MiB floor (every generation's scoped default) and headroom on top.
    vmem_needed = tile_n * bytes_per_row + 4 * LANE * 4 * splits
    vmem_limit_bytes = int(min(max(vmem_needed + (4 << 20), 16 << 20), 48 << 20))

    cost = pl.CostEstimate(
        flops=int(4 * n * d + 10 * n),
        transcendentals=int(n),
        bytes_accessed=int(n * d * (isz_x + isz_x1) + n * 4 + 4 * LANE * splits),
    )

    partials = pl.pallas_call(
        kernel,
        out_shape=jax.ShapeDtypeStruct((1, LANE * splits), jnp.float32),
        grid=(splits, tiles_per_split),
        in_specs=[
            pl.BlockSpec((tile_n, d), lambda g, i: (block_idx(g, i), 0)),
            pl.BlockSpec((tile_n, d), lambda g, i: (block_idx(g, i), 0)),
            pl.BlockSpec((tile_n, 1), lambda g, i: (block_idx(g, i), 0)),
        ],
        out_specs=pl.BlockSpec((1, LANE), lambda g, i: (0, g)),
        compiler_params=pltpu.CompilerParams(
            dimension_semantics=("parallel", "arbitrary"),
            vmem_limit_bytes=vmem_limit_bytes),
        cost_estimate=cost,
    )(x, x1, y2)

    # Every lane of split g's 128-wide slab holds that split's partial sum.
    per_split = partials[0, ::LANE]            # (splits,)
    return jnp.sum(per_split) / jnp.float32(n)


def _reference(x, x1, y):
    xf = x.astype(jnp.float32)
    x1f = x1.astype(jnp.float32)
    yf = jnp.asarray(y).astype(jnp.float32)
    diff = xf - x1f + EPS
    dist = jnp.sqrt(jnp.sum(diff * diff, axis=-1))
    return jnp.mean(0.5 * ((1.0 - yf) * dist**2
                           + yf * jnp.maximum(0.0, MARGIN - dist) ** 2))


if __name__ == "__main__":
    key = jax.random.PRNGKey(0)
    keys = jax.random.split(key, 9)

    # TODO(synk): the module's .cpu() device moves are no-ops under JAX/TPU.

    # Check 1: small f32 case (single tile, single split, exact fit).
    N, D = 8, 32
    x = jax.random.normal(keys[0], (N, D), dtype=jnp.float32)
    x1 = jax.random.normal(keys[1], (N, D), dtype=jnp.float32)
    y = jax.random.bernoulli(keys[2], 0.5, (N,)).astype(jnp.float32)
    loss = pairwise_loss(x, x1, y)
    jax.block_until_ready(loss)
    ref = _reference(x, x1, y)
    assert jnp.allclose(loss, ref, atol=1e-5, rtol=1e-5), (loss, ref)

    # Check 2: bf16 inputs, N not a multiple of the tile -> exercises the
    # ragged last block (no wrapper pad) and multi-tile accumulation.
    N2, D2 = 21, 32
    xb = jax.random.normal(keys[3], (N2, D2), dtype=jnp.bfloat16)
    x1b = jax.random.normal(keys[4], (N2, D2), dtype=jnp.bfloat16)
    yb = jax.random.bernoulli(keys[5], 0.5, (N2,)).astype(jnp.float32)
    loss2 = pairwise_loss(xb, x1b, yb, tile_n=16)
    jax.block_until_ready(loss2)
    ref2 = _reference(xb, x1b, yb)
    assert jnp.allclose(loss2, ref2, atol=1e-5, rtol=1e-5), (loss2, ref2)

    # Check 3: forced 2-way split with an odd number of tiles -> exercises the
    # clamped block-index path and the per-split partial-sum combine.
    N3, D3 = 300, 64
    xc = jax.random.normal(keys[6], (N3, D3), dtype=jnp.float32)
    x1c = jax.random.normal(keys[7], (N3, D3), dtype=jnp.float32)
    yc = jax.random.bernoulli(keys[8], 0.5, (N3,)).astype(jnp.float32)
    loss3 = pairwise_loss(xc, x1c, yc, tile_n=64, splits=2)
    jax.block_until_ready(loss3)
    ref3 = _reference(xc, x1c, yc)
    assert jnp.allclose(loss3, ref3, atol=1e-5, rtol=1e-5), (loss3, ref3)

    print("KERNEL_OK")
</pallas_src>

<mosaic_0001>
module attributes {stable_mosaic.version = 11 : i64} {
  func.func @_pairwise_loss_kernel(%arg0: i32, %arg1: i32, %arg2: memref<8x32xf32, #tpu.memory_space<vmem>>, %arg3: memref<8x32xf32, #tpu.memory_space<vmem>>, %arg4: memref<8x1xf32, #tpu.memory_space<vmem>>, %arg5: memref<1x128xf32, #tpu.memory_space<vmem>>) attributes {dimension_semantics = [#tpu.dimension_semantics<parallel>, #tpu.dimension_semantics<arbitrary>], iteration_bounds = array<i64: 1, 1>, scalar_prefetch = 0 : i64, scratch_operands = 0 : i64, tpu.core_type = #tpu.core_type<tc>, window_params = [{transform_indices = @transform_0, window_bounds = array<i64: 8, 32>}, {transform_indices = @transform_1, window_bounds = array<i64: 8, 32>}, {transform_indices = @transform_2, window_bounds = array<i64: 8, 1>}, {transform_indices = @transform_3, window_bounds = array<i64: 1, 128>}]} {
    %c0_i32 = arith.constant 0 : i32
    %0 = arith.cmpi eq, %arg1, %c0_i32 : i32
    %1 = arith.extui %0 : i1 to i32
    %c0_i32_0 = arith.constant 0 : i32
    %2 = arith.cmpi ne, %1, %c0_i32_0 : i32
    scf.if %2 {
      %cst_17 = arith.constant 0.000000e+00 : f32
      %36 = vector.broadcast %cst_17 : f32 to vector<1x128xf32>
      %c0_18 = arith.constant 0 : index
      %c0_19 = arith.constant 0 : index
      %37 = vector.load %arg5[%c0_18, %c0_19] : memref<1x128xf32, #tpu.memory_space<vmem>>, vector<1x128xf32>
      tpu.vector_store %arg5[%c0_18, %c0_19], %36 {strides = array<i32>} : memref<1x128xf32, #tpu.memory_space<vmem>>, vector<1x128xf32>,
    } else {
    }
    %c0 = arith.constant 0 : index
    %c0_1 = arith.constant 0 : index
    %3 = vector.load %arg2[%c0, %c0_1] : memref<8x32xf32, #tpu.memory_space<vmem>>, vector<8x32xf32>
    %c0_2 = arith.constant 0 : index
    %c0_3 = arith.constant 0 : index
    %4 = vector.load %arg3[%c0_2, %c0_3] : memref<8x32xf32, #tpu.memory_space<vmem>>, vector<8x32xf32>
    %5 = arith.subf %3, %4 : vector<8x32xf32>
    %cst = arith.constant 9.99999997E-7 : f32
    %6 = vector.broadcast %cst : f32 to vector<8x32xf32>
    %7 = arith.addf %5, %6 : vector<8x32xf32>
    %8 = arith.mulf %7, %7 : vector<8x32xf32>
    %cst_4 = arith.constant dense<0.000000e+00> : vector<8xf32>
    %9 = vector.multi_reduction <add>, %8, %cst_4 [1] : vector<8x32xf32> to vector<8xf32>
    %10 = vector.shape_cast %9 : vector<8xf32> to vector<8x1xf32>
    %11 = math.sqrt %10 : vector<8x1xf32>
    %c0_5 = arith.constant 0 : index
    %c0_6 = arith.constant 0 : index
    %12 = vector.load %arg4[%c0_5, %c0_6] : memref<8x1xf32, #tpu.memory_space<vmem>>, vector<8x1xf32>
    %cst_7 = arith.constant 1.000000e+00 : f32
    %13 = vector.broadcast %cst_7 : f32 to vector<8x1xf32>
    %14 = arith.subf %13, %11 : vector<8x1xf32>
    %cst_8 = arith.constant 0.000000e+00 : f32
    %15 = vector.broadcast %cst_8 : f32 to vector<8x1xf32>
    %16 = arith.maximumf %15, %14 : vector<8x1xf32>
    %cst_9 = arith.constant 1.000000e+00 : f32
    %17 = vector.broadcast %cst_9 : f32 to vector<8x1xf32>
    %18 = arith.subf %17, %12 : vector<8x1xf32>
    %19 = arith.mulf %18, %10 : vector<8x1xf32>
    %20 = arith.mulf %16, %16 : vector<8x1xf32>
    %21 = arith.mulf %12, %20 : vector<8x1xf32>
    %22 = arith.addf %19, %21 : vector<8x1xf32>
    %cst_10 = arith.constant 5.000000e-01 : f32
    %23 = vector.broadcast %cst_10 : f32 to vector<8x1xf32>
    %24 = arith.mulf %23, %22 : vector<8x1xf32>
    %c1_i32 = arith.constant 1 : i32
    %25 = arith.muli %arg0, %c1_i32 : i32
    %26 = arith.addi %25, %arg1 : i32
    %c8_i32 = arith.constant 8 : i32
    %27 = arith.muli %26, %c8_i32 : i32
    %c8_i32_11 = arith.constant 8 : i32
    %28 = arith.addi %27, %c8_i32_11 : i32
    %c8_i32_12 = arith.constant 8 : i32
    %29 = arith.cmpi sle, %28, %c8_i32_12 : i32
    %30 = arith.extui %29 : i1 to i32
    %c0_i32_13 = arith.constant 0 : i32
    %31 = arith.cmpi ne, %30, %c0_i32_13 : i32
    scf.if %31 {
      %c0_17 = arith.constant 0 : index
      %c0_18 = arith.constant 0 : index
      %36 = vector.load %arg5[%c0_17, %c0_18] : memref<1x128xf32, #tpu.memory_space<vmem>>, vector<1x128xf32>
      %37 = vector.shape_cast %24 : vector<8x1xf32> to vector<1x8x1xf32>
      %cst_19 = arith.constant dense<0.000000e+00> : vector<1xf32>
      %38 = vector.multi_reduction <add>, %37, %cst_19 [1, 2] : vector<1x8x1xf32> to vector<1xf32>
      %39 = vector.shape_cast %38 : vector<1xf32> to vector<1x1x1xf32>
      %40 = vector.extract %39[0, 0, 0] : f32 from vector<1x1x1xf32>
      %41 = vector.broadcast %40 : f32 to vector<1x128xf32>
      %42 = arith.addf %36, %41 : vector<1x128xf32>
      %c0_20 = arith.constant 0 : index
      %c0_21 = arith.constant 0 : index
      %43 = vector.load %arg5[%c0_20, %c0_21] : memref<1x128xf32, #tpu.memory_space<vmem>>, vector<1x128xf32>
      tpu.vector_store %arg5[%c0_20, %c0_21], %42 {strides = array<i32>} : memref<1x128xf32, #tpu.memory_space<vmem>>, vector<1x128xf32>,
    } else {
    }
    %c8_i32_14 = arith.constant 8 : i32
    %32 = arith.addi %27, %c8_i32_14 : i32
    %c8_i32_15 = arith.constant 8 : i32
    %33 = arith.cmpi sgt, %32, %c8_i32_15 : i32
    %34 = arith.extui %33 : i1 to i32
    %c0_i32_16 = arith.constant 0 : i32
    %35 = arith.cmpi ne, %34, %c0_i32_16 : i32
    scf.if %35 {
      %36 = tpu.iota {dimensions = array<i32: 0>} : vector<8x1xi32>
      %37 = vector.broadcast %27 : i32 to vector<8x1xi32>
      %38 = arith.addi %36, %37 : vector<8x1xi32>
      %c0_17 = arith.constant 0 : index
      %c0_18 = arith.constant 0 : index
      %39 = vector.load %arg5[%c0_17, %c0_18] : memref<1x128xf32, #tpu.memory_space<vmem>>, vector<1x128xf32>
      %c8_i32_19 = arith.constant 8 : i32
      %40 = vector.broadcast %c8_i32_19 : i32 to vector<8x1xi32>
      %41 = arith.cmpi slt, %38, %40 : vector<8x1xi32>
      %cst_20 = arith.constant 0.000000e+00 : f32
      %42 = vector.broadcast %cst_20 : f32 to vector<8x1xf32>
      %43 = arith.select %41, %24, %42 : vector<8x1xi1>, vector<8x1xf32>
      %44 = vector.shape_cast %43 : vector<8x1xf32> to vector<1x8x1xf32>
      %cst_21 = arith.constant dense<0.000000e+00> : vector<1xf32>
      %45 = vector.multi_reduction <add>, %44, %cst_21 [1, 2] : vector<1x8x1xf32> to vector<1xf32>
      %46 = vector.shape_cast %45 : vector<1xf32> to vector<1x1x1xf32>
      %47 = vector.extract %46[0, 0, 0] : f32 from vector<1x1x1xf32>
      %48 = vector.broadcast %47 : f32 to vector<1x128xf32>
      %49 = arith.addf %39, %48 : vector<1x128xf32>
      %c0_22 = arith.constant 0 : index
      %c0_23 = arith.constant 0 : index
      %50 = vector.load %arg5[%c0_22, %c0_23] : memref<1x128xf32, #tpu.memory_space<vmem>>, vector<1x128xf32>
      tpu.vector_store %arg5[%c0_22, %c0_23], %49 {strides = array<i32>} : memref<1x128xf32, #tpu.memory_space<vmem>>, vector<1x128xf32>,
    } else {
    }
    return
  }
  func.func @transform_0(%arg0: i32, %arg1: i32) -> (i32, i32) {
    %c1_i32 = arith.constant 1 : i32
    %0 = arith.muli %arg0, %c1_i32 : i32
    %1 = arith.addi %0, %arg1 : i32
    %c0_i32 = arith.constant 0 : i32
    %c0_i32_0 = arith.constant 0 : i32
    return %1, %c0_i32 : i32, i32
  }
  func.func @transform_1(%arg0: i32, %arg1: i32) -> (i32, i32) {
    %c1_i32 = arith.constant 1 : i32
    %0 = arith.muli %arg0, %c1_i32 : i32
    %1 = arith.addi %0, %arg1 : i32
    %c0_i32 = arith.constant 0 : i32
    %c0_i32_0 = arith.constant 0 : i32
    return %1, %c0_i32 : i32, i32
  }
  func.func @transform_2(%arg0: i32, %arg1: i32) -> (i32, i32) {
    %c1_i32 = arith.constant 1 : i32
    %0 = arith.muli %arg0, %c1_i32 : i32
    %1 = arith.addi %0, %arg1 : i32
    %c0_i32 = arith.constant 0 : i32
    %c0_i32_0 = arith.constant 0 : i32
    return %1, %c0_i32 : i32, i32
  }
  func.func @transform_3(%arg0: i32, %arg1: i32) -> (i32, i32) {
    %c0_i32 = arith.constant 0 : i32
    %c0_i32_0 = arith.constant 0 : i32
    return %c0_i32, %arg0 : i32, i32
  }
}

</mosaic_0001>

<llo_original>
// kernel: tpu_custom_call.1
$region0: #{tpu_custom_call.1}
  #allocation0 [shape = 'u32[]', space=smem, size = 0x4, offset = 0x4, fixed_abs, tag = 'smem constant byte address 0x4 - core index']
  #allocation1 [shape = 'u32[72,128]{1,0:T(1,128)}', space=vmem, size = 0x9000, scoped, tag = 'internal scratch']
  %s0 = inlined_call_operand.vmem [shape: f32[8,32], index: 0, kind: input, shape index: {}]
  %s1 = inlined_call_operand.hbm [shape: f32[8,32], index: 1, kind: input, shape index: {}]
  %s2 = inlined_call_operand.vmem [shape: f32[8,1], index: 2, kind: input, shape index: {}]
  %s3 = inlined_call_operand.hbm [shape: f32[1,128], index: 3, kind: output, shape index: {}]
  %s4 = sld [smem:[#allocation0]]
  $region38: #{tpu_custom_call.1} parent=0
    _
  %s6 = ssub.s32 1, %s4
  %s7 = scalar_select 0, %s6, %s4
  $region1: #{tpu_custom_call.1} parent=0
    #allocation2 [shape = 'u8[4096]{0}', space=vmem, size = 0x1000, scoped, tag = 'input window, operand 1, single buffered']
    #allocation3 [shape = 's32[1]{0}', space=sflag, size = 0x4, scoped, tag = 'scoped memory for tpu_custom_call.1']
    #allocation4 [shape = 's32[1]{0}', space=sflag, size = 0x4, scoped, tag = 'scoped memory for tpu_custom_call.1']
    #allocation5 [shape = 'u8[512]{0}', space=vmem, size = 0x400, scoped, tag = 'output window, operand 0, single buffered']
    %8 = vsyncpa [#allocation3], 0
    %9 = vsyncpa [#allocation4], 0
    // Predicated region
    $region2: #{tpu_custom_call.1} parent=1 // pred_check
      _
    $region3: #{tpu_custom_call.1} parent=1 // pred_check_branch
      %11 = sbr.rel (0) target = $region5
    $region4: #{tpu_custom_call.1} parent=1 // pred_region
      %s12 = sadd.s32 0, 0
      %p13 = scmp.lt.s32.totalorder %s12, 0
      %s14 = scalar_select %p13, %s12, 0
      %s15 = smul.addr %s14, 8
      %s16 = scalar_lea.vmem %s0, %s15
      %s17 = sadd.s32 0, 0
    $region5: #{tpu_custom_call.1} parent=1 // pred_fallthru
      _
    // Predicated region
    $region6: #{tpu_custom_call.1} parent=1 // pred_check
      _
    $region7: #{tpu_custom_call.1} parent=1 // pred_check_branch
      %19 = sbr.rel (0) target = $region9
    $region8: #{tpu_custom_call.1} parent=1 // pred_region
      %s20 = sadd.s32 0, 0
      %22 = vsyncadd [#allocation3], 0
      %s23 = smul.addr %s20, 8
      %s24 = scalar_lea.hbm %s1, %s23
      %s26 = sshll.u32 %s24, 4
      %s27 = int_to_ptr.hbm [resolvable:$true] %s26
      %s28 = sshll.u32 [#allocation2], 4
      %s29 = int_to_ptr.vmem [resolvable:$true] %s28
      %31 = dma.hbm_to_vmem [thread:$0]  %s27, 128, %s29, [#allocation3]
    $region9: #{tpu_custom_call.1} parent=1 // pred_fallthru
      _
    // Predicated region
    $region10: #{tpu_custom_call.1} parent=1 // pred_check
      _
    $region11: #{tpu_custom_call.1} parent=1 // pred_check_branch
      %33 = sbr.rel (0) target = $region13
    $region12: #{tpu_custom_call.1} parent=1 // pred_region
      %s34 = sadd.s32 0, 0
      %p35 = scmp.lt.s32.totalorder %s34, 0
      %s36 = scalar_select %p35, %s34, 0
      %s37 = smul.addr %s36, 8
      %s38 = scalar_lea.vmem %s2, %s37
      %s39 = sadd.s32 0, 0
    $region13: #{tpu_custom_call.1} parent=1 // pred_fallthru
      _
    // Predicated region
    $region14: #{tpu_custom_call.1} parent=1 // pred_check
      _
    $region15: #{tpu_custom_call.1} parent=1 // pred_check_branch
      %41 = sbr.rel (0) target = $region17
    $region16: #{tpu_custom_call.1} parent=1 // pred_region
      %43 = dma.done [#allocation3], 128
    $region17: #{tpu_custom_call.1} parent=1 // pred_fallthru
      _
    %s44 = sadd.s32 0, 0
    %p45 = scmp.lt.s32.totalorder %s44, 0
    %s46 = scalar_select %p45, %s44, 0
    %s47 = smul.addr %s46, 8
    %s48 = scalar_lea.vmem %s0, %s47
    %s49 = sadd.s32 0, 0
    %p50 = scmp.lt.s32.totalorder %s49, 0
    %s51 = scalar_select %p50, %s49, 0
    %s52 = smul.addr %s51, 8
    %s53 = scalar_lea.vmem %s2, %s52
    %s54 = sadd.s32 0, 0
    %p55 = scmp.lt.s32.totalorder %s54, 0
    %s56 = scalar_select %p55, %s54, 0
    %s57 = smul.addr %s56, 8
    %s58 = scalar_lea.vmem %s0, %s57
    %s59 = sadd.s32 0, 0
    %s60 = sadd.s32 0, 0
    %s61 = sadd.s32 0, 0
    %p62 = scmp.lt.s32.totalorder %s61, 0
    %s63 = scalar_select %p62, %s61, 0
    %s64 = smul.addr %s63, 8
    %s65 = scalar_lea.vmem %s2, %s64
    %s66 = sadd.s32 0, 0
    %p67 = scmp.eq.s32.totalorder 0, 0
    // Predicated region
    $region18: #{tpu_custom_call.1} parent=1 // pred_check
      %p68 = pneg %p67
    $region19: #{tpu_custom_call.1} parent=1 // pred_check_branch
      %70 = sbr.rel (%p68) target = $region21
    $region20: #{tpu_custom_call.1} parent=1 // pred_region
      %71 = vst [vmem:[#allocation5] sm:$0x1] 0.0
    $region21: #{tpu_custom_call.1} parent=1 // pred_fallthru
      _
    %v72 = vld [vmem:[%s58] sm:$0xff]
    %v73 = vld [vmem:[#allocation2] sm:$0xff]
    %v74 = vsub.f32 %v72, %v73
    %v75 = vadd.f32 %v74, 1e-06
    %v76 = vmul.f32 %v75, %v75
    %vm77 = vcmask 261120
    %v78 = vsel %vm77, %v76, 0.0
    %79 = vadd.xlane.f32.xlu0 %v78
    %v80 = vpop.xlane.xlu0 %79
    %v81 = vrsqrt.pop %v80
    %v82 = vmul.f32 %v81, %v80
    %v83 = vmul.f32 %v82, %v81
    %v84 = vmul.f32 0.5, %v83
    %v85 = vsub.f32 1.5, %v84
    %v86 = vmul.f32 %v81, %v85
    %v87 = vmul.f32 %v80, %v86
    %vm88 = vcmp.eq.f32.partialorder %v80, inf
    %v89 = vsel %vm88, %v80, %v87
    %vm90 = vcmp.eq.f32.partialorder %v80, 0.0
    %v91 = vand.u32 %v80, 2147483648
    %v92 = vsel %vm90, %v91, %v89
    %v93 = vld [vmem:[%s65] sm:$0xff]
    %v94 = vsub.f32 1.0, %v92
    %v95 = vmax.f32 %v94, 0.0
    %v96 = vsub.f32 1.0, %v93
    %v97 = vmul.f32 %v96, %v80
    %v98 = vmul.f32 %v95, %v95
    %v99 = vmul.f32 %v93, %v98
    %v100 = vadd.f32 %v97, %v99
    %v101 = vmul.f32 %v100, 0.5
    %s102 = sadd.s32 0, 0
    %s103 = smul.u32 %s102, 8
    %s104 = sadd.s32 %s103, 8
    %p105 = scmp.le.s32.totalorder %s104, 8
    // Predicated region
    $region22: #{tpu_custom_call.1} parent=1 // pred_check
      %p106 = pneg %p105
    $region23: #{tpu_custom_call.1} parent=1 // pred_check_branch
      %108 = sbr.rel (%p106) target = $region25
    $region24: #{tpu_custom_call.1} parent=1 // pred_region
      %v109 = vld [vmem:[#allocation5] sm:$0x1]
      %vm110 = vcmask 7168
      %v111 = vsel %vm110, %v101, 0.0
      %112 = vadd.xlane.f32.xlu0 %v111
      %v113 = vpop.xlane.xlu0 %112
      %v114 = vrot.slane %v113, 4
      %v115 = vadd.f32 %v113, %v114
      %v116 = vrot.slane %v115, 2
      %v117 = vadd.f32 %v115, %v116
      %v118 = vrot.slane %v117, 1
      %v119 = vadd.f32 %v117, %v118
      %s120 = vtos %v119
      %v121 = vstv %s120
      %v122 = vadd.f32 %v109, %v121
      %123 = vst [vmem:[#allocation5] sm:$0x1] %v122
    $region25: #{tpu_custom_call.1} parent=1 // pred_fallthru
      _
    %p124 = scmp.gt.s32.totalorder %s104, 8
    // Predicated region
    $region26: #{tpu_custom_call.1} parent=1 // pred_check
      %p125 = pneg %p124
    $region27: #{tpu_custom_call.1} parent=1 // pred_check_branch
      %127 = sbr.rel (%p125) target = $region29
    $region28: #{tpu_custom_call.1} parent=1 // pred_region
      %v128 = vlaneseq
      %v129 = vshrl.u32 %v128, 7
      %v130 = vstv %s103
      %v131 = vadd.s32 %v129, %v130
      %v132 = vld [vmem:[#allocation5] sm:$0x1]
      %vm133 = vcmp.lt.s32.totalorder %v131, 8
      %v134 = vsel %vm133, %v101, 0.0
      %vm135 = vcmask 7168
      %v136 = vsel %vm135, %v134, 0.0
      %137 = vadd.xlane.f32.xlu0 %v136
      %v138 = vpop.xlane.xlu0 %137
      %v139 = vrot.slane %v138, 4
      %v140 = vadd.f32 %v138, %v139
      %v141 = vrot.slane %v140, 2
      %v142 = vadd.f32 %v140, %v141
      %v143 = vrot.slane %v142, 1
      %v144 = vadd.f32 %v142, %v143
      %s145 = vtos %v144
      %v146 = vstv %s145
      %v147 = vadd.f32 %v132, %v146
      %148 = vst [vmem:[#allocation5] sm:$0x1] %v147
    $region29: #{tpu_custom_call.1} parent=1 // pred_fallthru
      _
    // Predicated region
    $region30: #{tpu_custom_call.1} parent=1 // pred_check
      _
    $region31: #{tpu_custom_call.1} parent=1 // pred_check_branch
      %150 = sbr.rel (0) target = $region33
    $region32: #{tpu_custom_call.1} parent=1 // pred_region
      %152 = vsyncadd [#allocation4], 0
      %s154 = sshll.u32 [#allocation5], 4
      %s155 = int_to_ptr.vmem [resolvable:$true] %s154
      %s156 = sshll.u32 %s3, 4
      %s157 = int_to_ptr.hbm [resolvable:$true] %s156
      %159 = dma.vmem_to_hbm [thread:$0]  %s155, 16, %s157, [#allocation4]
    $region33: #{tpu_custom_call.1} parent=1 // pred_fallthru
      _
    // Predicated region
    $region34: #{tpu_custom_call.1} parent=1 // pred_check
      _
    $region35: #{tpu_custom_call.1} parent=1 // pred_check_branch
      %161 = sbr.rel (0) target = $region37
    $region36: #{tpu_custom_call.1} parent=1 // pred_region
      %163 = dma.done [#allocation4], 16
    $region37: #{tpu_custom_call.1} parent=1 // pred_fallthru
      _
    %164 = vsyncpa [#allocation3], 1
    %165 = vsyncpa [#allocation4], 1

</llo_original>
